<compile_context>
chip_gen: v7x
topology: tpu7x:2x2x1
jax: 0.10.0
libtpu: 0.0.40
codegen_flags: <defaults>
</compile_context>

<pallas_src>
import jax
import jax.numpy as jnp
from jax import lax
from jax.experimental import pallas as pl
from jax.experimental.pallas import tpu as pltpu

LANES = 128  # vreg minor-dim width; one "chunk" of the batch dimension


def cnn_kernel(x_ref, w_ref, b_ref, o_ref):
    """Fused conv1d(VALID, C_in=1) + temporal max, then bias + ReLU.

    Layout: batch on lanes (128-wide chunks), e_word on sublanes.

    x_ref: (B, L, 128)  f32 -- B lane-chunks of the batch; time L on sublanes
    w_ref: (E, K)       f32 -- Conv1d weight (E,1,K) with channel dim squeezed
    b_ref: (E, 1)       f32 -- bias
    o_ref: (B, E, 128)  f32 -- relu(max_t conv[n, :, t] + b) per chunk
    """
    B, L, C = x_ref.shape
    E, K = w_ref.shape
    L_out = L - K + 1  # VALID conv output length

    # Hoisted loop invariants: broadcast each weight column and the bias across
    # the 128 lanes once per grid step (K+1 small XLU broadcasts total).
    w = w_ref[...]                                                   # (E, K)
    wb = [jnp.broadcast_to(w[:, j:j + 1], (E, C)) for j in range(K)]  # K x (E,128)
    bb = jnp.broadcast_to(b_ref[...], (E, C))                         # (E,128)

    def chunk_body(ci, carry):
        xc = x_ref[ci]                                   # (L, 128) load
        # Running max over time; every intermediate is a dense (E, 128) tile.
        m = None
        for t in range(L_out):                           # static unroll (small)
            c = xc[t:t + 1, :] * wb[0]                   # (1,128)*(E,128)->(E,128)
            for j in range(1, K):                        # static unroll over taps
                c = c + xc[t + j:t + j + 1, :] * wb[j]
            m = c if m is None else jnp.maximum(m, c)
        # Deferred bias + ReLU on the reduced tile (exact: ReLU monotone, bias
        # time-invariant), then a lane-dense, unmasked 128-wide store.
        o_ref[ci] = jnp.maximum(m + bb, 0.0)
        return carry

    # Rolled loop over lane-chunks bounds vreg live ranges to one chunk.
    lax.fori_loop(0, B, chunk_body, 0)


def cnn_forward(x, weight, bias, *, block_chunks=16):
    """x: (N, 1, L) f32; weight: (E, 1, K); bias: (E,). Returns (N, E, 1)."""
    N, C_in, L = x.shape
    assert C_in == 1, "this CNN uses in_channels=1"
    E, _, K = weight.shape
    assert L >= K, "conv output length would be < 1 (L < K)"

    # Chunk the batch into 128-wide lane groups; pad N only up to the chunk.
    NC = pl.cdiv(N, LANES)            # number of 128-wide lane chunks
    N_pad = NC * LANES

    x2 = x[:, 0, :].astype(jnp.float32)                       # (N, L)
    if N_pad != N:
        x2 = jnp.pad(x2, ((0, N_pad - N), (0, 0)))            # tiny, fuses w/ transpose
    x3 = x2.reshape(NC, LANES, L).transpose(0, 2, 1)          # (NC, L, 128): N on lanes

    w2 = weight[:, 0, :].astype(jnp.float32)                  # (E, K)
    b2 = bias.astype(jnp.float32)[:, None]                    # (E, 1)

    # Chunks per grid step: big enough to amortize ~0.35us/step, but keep >=2
    # grid steps when possible so v7x's two TensorCores both get work.
    B = max(1, min(block_chunks, pl.cdiv(NC, 2)))
    grid = (pl.cdiv(NC, B),)          # last block may be partial (OOB-masked)

    out = pl.pallas_call(
        cnn_kernel,
        out_shape=jax.ShapeDtypeStruct((NC, E, LANES), jnp.float32),
        grid=grid,
        in_specs=[
            pl.BlockSpec((B, L, LANES), lambda i: (i, 0, 0)),   # batch-chunk tiled
            pl.BlockSpec((E, K), lambda i: (0, 0)),             # whole weight, resident
            pl.BlockSpec((E, 1), lambda i: (0, 0)),             # whole bias, resident
        ],
        out_specs=pl.BlockSpec((B, E, LANES), lambda i: (i, 0, 0)),
        compiler_params=pltpu.CompilerParams(
            dimension_semantics=("parallel",)),                 # megacore-shard on v7x
    )(x3, w2, b2)

    # Un-chunk: (NC, E, 128) -> (N, E, 1). Small transpose; padded rows dropped.
    out = out.transpose(0, 2, 1).reshape(N_pad, E)
    if N_pad != N:
        out = out[:N]
    return out[:, :, None]


def cnn_reference(x, weight, bias):
    """Plain-JAX reference mirroring the PyTorch forward (relu then max-pool)."""
    conv = lax.conv_general_dilated(
        x, weight, window_strides=(1,), padding="VALID",
        dimension_numbers=("NCH", "OIH", "NCH"),
    ) + bias[None, :, None]
    return jnp.max(jax.nn.relu(conv), axis=2, keepdims=True)


if __name__ == "__main__":
    # Module hyperparameters (e_char is unused by this module's __init__).
    e_char, e_word, k = 4, 32, 5
    batch, m_word = 2, 16                        # x: (batch, 1, m_word)

    key = jax.random.PRNGKey(0)
    k_x, k_w, k_b, k_x2 = jax.random.split(key, 4)

    # Deterministic PyTorch-style Conv1d init: U(-1/sqrt(fan_in), 1/sqrt(fan_in))
    fan_in = 1 * k
    bound = 1.0 / (fan_in ** 0.5)
    weight = jax.random.uniform(k_w, (e_word, 1, k), jnp.float32, -bound, bound)
    bias = jax.random.uniform(k_b, (e_word,), jnp.float32, -bound, bound)

    # Primary check: the module's canonical small shape.
    x = jax.random.normal(k_x, (batch, 1, m_word), jnp.float32)
    out = jax.block_until_ready(cnn_forward(x, weight, bias))
    ref = jax.block_until_ready(cnn_reference(x, weight, bias))
    assert out.shape == (batch, e_word, 1), out.shape
    assert jnp.allclose(out, ref, atol=1e-5, rtol=1e-5), \
        f"max abs err = {jnp.max(jnp.abs(out - ref))}"

    # Secondary check: exercises N-padding, the in-kernel chunk loop,
    # a multi-step grid and an OOB-masked partial last block.
    n2 = 300
    xb = jax.random.normal(k_x2, (n2, 1, m_word), jnp.float32)
    out2 = jax.block_until_ready(cnn_forward(xb, weight, bias))
    ref2 = jax.block_until_ready(cnn_reference(xb, weight, bias))
    assert out2.shape == (n2, e_word, 1), out2.shape
    assert jnp.allclose(out2, ref2, atol=1e-5, rtol=1e-5), \
        f"max abs err = {jnp.max(jnp.abs(out2 - ref2))}"

    print("KERNEL_OK")
</pallas_src>

<mosaic_0001>
module attributes {stable_mosaic.version = 11 : i64} {
  func.func @cnn_kernel(%arg0: i32, %arg1: memref<1x16x128xf32, #tpu.memory_space<vmem>>, %arg2: memref<32x5xf32, #tpu.memory_space<vmem>>, %arg3: memref<32x1xf32, #tpu.memory_space<vmem>>, %arg4: memref<1x32x128xf32, #tpu.memory_space<vmem>>) attributes {dimension_semantics = [#tpu.dimension_semantics<parallel>], iteration_bounds = array<i64: 1>, scalar_prefetch = 0 : i64, scratch_operands = 0 : i64, tpu.core_type = #tpu.core_type<tc>, window_params = [{transform_indices = @transform_0, window_bounds = array<i64: 1, 16, 128>}, {pipeline_mode = #tpu.pipeline_mode<synchronous>, transform_indices = @transform_1, window_bounds = array<i64: 32, 5>}, {pipeline_mode = #tpu.pipeline_mode<synchronous>, transform_indices = @transform_2, window_bounds = array<i64: 32, 1>}, {transform_indices = @transform_3, window_bounds = array<i64: 1, 32, 128>}]} {
    %c0 = arith.constant 0 : index
    %c0_0 = arith.constant 0 : index
    %0 = vector.load %arg2[%c0, %c0_0] : memref<32x5xf32, #tpu.memory_space<vmem>>, vector<32x5xf32>
    %1 = vector.extract_strided_slice %0 {offsets = [0, 0], sizes = [32, 1], strides = [1, 1]} : vector<32x5xf32> to vector<32x1xf32>
    %2 = vector.shape_cast %1 : vector<32x1xf32> to vector<32x1xf32>
    %3 = vector.broadcast %2 : vector<32x1xf32> to vector<32x128xf32>
    %4 = vector.extract_strided_slice %0 {offsets = [0, 1], sizes = [32, 1], strides = [1, 1]} : vector<32x5xf32> to vector<32x1xf32>
    %5 = vector.shape_cast %4 : vector<32x1xf32> to vector<32x1xf32>
    %6 = vector.broadcast %5 : vector<32x1xf32> to vector<32x128xf32>
    %7 = vector.extract_strided_slice %0 {offsets = [0, 2], sizes = [32, 1], strides = [1, 1]} : vector<32x5xf32> to vector<32x1xf32>
    %8 = vector.shape_cast %7 : vector<32x1xf32> to vector<32x1xf32>
    %9 = vector.broadcast %8 : vector<32x1xf32> to vector<32x128xf32>
    %10 = vector.extract_strided_slice %0 {offsets = [0, 3], sizes = [32, 1], strides = [1, 1]} : vector<32x5xf32> to vector<32x1xf32>
    %11 = vector.shape_cast %10 : vector<32x1xf32> to vector<32x1xf32>
    %12 = vector.broadcast %11 : vector<32x1xf32> to vector<32x128xf32>
    %13 = vector.extract_strided_slice %0 {offsets = [0, 4], sizes = [32, 1], strides = [1, 1]} : vector<32x5xf32> to vector<32x1xf32>
    %14 = vector.shape_cast %13 : vector<32x1xf32> to vector<32x1xf32>
    %15 = vector.broadcast %14 : vector<32x1xf32> to vector<32x128xf32>
    %c0_1 = arith.constant 0 : index
    %c0_2 = arith.constant 0 : index
    %16 = vector.load %arg3[%c0_1, %c0_2] : memref<32x1xf32, #tpu.memory_space<vmem>>, vector<32x1xf32>
    %17 = vector.shape_cast %16 : vector<32x1xf32> to vector<32x1xf32>
    %18 = vector.broadcast %17 : vector<32x1xf32> to vector<32x128xf32>
    %c0_i32 = arith.constant 0 : i32
    %19 = arith.index_cast %c0_i32 : i32 to index
    %c0_3 = arith.constant 0 : index
    %c0_4 = arith.constant 0 : index
    %20 = vector.load %arg1[%19, %c0_3, %c0_4] : memref<1x16x128xf32, #tpu.memory_space<vmem>>, vector<1x16x128xf32>
    %21 = vector.shape_cast %20 : vector<1x16x128xf32> to vector<16x128xf32>
    %22 = vector.extract_strided_slice %21 {offsets = [0, 0], sizes = [1, 128], strides = [1, 1]} : vector<16x128xf32> to vector<1x128xf32>
    %23 = vector.broadcast %22 : vector<1x128xf32> to vector<32x128xf32>
    %24 = arith.mulf %23, %3 : vector<32x128xf32>
    %25 = vector.extract_strided_slice %21 {offsets = [1, 0], sizes = [1, 128], strides = [1, 1]} : vector<16x128xf32> to vector<1x128xf32>
    %26 = vector.broadcast %25 : vector<1x128xf32> to vector<32x128xf32>
    %27 = arith.mulf %26, %6 : vector<32x128xf32>
    %28 = arith.addf %24, %27 : vector<32x128xf32>
    %29 = vector.extract_strided_slice %21 {offsets = [2, 0], sizes = [1, 128], strides = [1, 1]} : vector<16x128xf32> to vector<1x128xf32>
    %30 = vector.broadcast %29 : vector<1x128xf32> to vector<32x128xf32>
    %31 = arith.mulf %30, %9 : vector<32x128xf32>
    %32 = arith.addf %28, %31 : vector<32x128xf32>
    %33 = vector.extract_strided_slice %21 {offsets = [3, 0], sizes = [1, 128], strides = [1, 1]} : vector<16x128xf32> to vector<1x128xf32>
    %34 = vector.broadcast %33 : vector<1x128xf32> to vector<32x128xf32>
    %35 = arith.mulf %34, %12 : vector<32x128xf32>
    %36 = arith.addf %32, %35 : vector<32x128xf32>
    %37 = vector.extract_strided_slice %21 {offsets = [4, 0], sizes = [1, 128], strides = [1, 1]} : vector<16x128xf32> to vector<1x128xf32>
    %38 = vector.broadcast %37 : vector<1x128xf32> to vector<32x128xf32>
    %39 = arith.mulf %38, %15 : vector<32x128xf32>
    %40 = arith.addf %36, %39 : vector<32x128xf32>
    %41 = vector.extract_strided_slice %21 {offsets = [1, 0], sizes = [1, 128], strides = [1, 1]} : vector<16x128xf32> to vector<1x128xf32>
    %42 = vector.broadcast %41 : vector<1x128xf32> to vector<32x128xf32>
    %43 = arith.mulf %42, %3 : vector<32x128xf32>
    %44 = vector.extract_strided_slice %21 {offsets = [2, 0], sizes = [1, 128], strides = [1, 1]} : vector<16x128xf32> to vector<1x128xf32>
    %45 = vector.broadcast %44 : vector<1x128xf32> to vector<32x128xf32>
    %46 = arith.mulf %45, %6 : vector<32x128xf32>
    %47 = arith.addf %43, %46 : vector<32x128xf32>
    %48 = vector.extract_strided_slice %21 {offsets = [3, 0], sizes = [1, 128], strides = [1, 1]} : vector<16x128xf32> to vector<1x128xf32>
    %49 = vector.broadcast %48 : vector<1x128xf32> to vector<32x128xf32>
    %50 = arith.mulf %49, %9 : vector<32x128xf32>
    %51 = arith.addf %47, %50 : vector<32x128xf32>
    %52 = vector.extract_strided_slice %21 {offsets = [4, 0], sizes = [1, 128], strides = [1, 1]} : vector<16x128xf32> to vector<1x128xf32>
    %53 = vector.broadcast %52 : vector<1x128xf32> to vector<32x128xf32>
    %54 = arith.mulf %53, %12 : vector<32x128xf32>
    %55 = arith.addf %51, %54 : vector<32x128xf32>
    %56 = vector.extract_strided_slice %21 {offsets = [5, 0], sizes = [1, 128], strides = [1, 1]} : vector<16x128xf32> to vector<1x128xf32>
    %57 = vector.broadcast %56 : vector<1x128xf32> to vector<32x128xf32>
    %58 = arith.mulf %57, %15 : vector<32x128xf32>
    %59 = arith.addf %55, %58 : vector<32x128xf32>
    %60 = arith.maximumf %40, %59 : vector<32x128xf32>
    %61 = vector.extract_strided_slice %21 {offsets = [2, 0], sizes = [1, 128], strides = [1, 1]} : vector<16x128xf32> to vector<1x128xf32>
    %62 = vector.broadcast %61 : vector<1x128xf32> to vector<32x128xf32>
    %63 = arith.mulf %62, %3 : vector<32x128xf32>
    %64 = vector.extract_strided_slice %21 {offsets = [3, 0], sizes = [1, 128], strides = [1, 1]} : vector<16x128xf32> to vector<1x128xf32>
    %65 = vector.broadcast %64 : vector<1x128xf32> to vector<32x128xf32>
    %66 = arith.mulf %65, %6 : vector<32x128xf32>
    %67 = arith.addf %63, %66 : vector<32x128xf32>
    %68 = vector.extract_strided_slice %21 {offsets = [4, 0], sizes = [1, 128], strides = [1, 1]} : vector<16x128xf32> to vector<1x128xf32>
    %69 = vector.broadcast %68 : vector<1x128xf32> to vector<32x128xf32>
    %70 = arith.mulf %69, %9 : vector<32x128xf32>
    %71 = arith.addf %67, %70 : vector<32x128xf32>
    %72 = vector.extract_strided_slice %21 {offsets = [5, 0], sizes = [1, 128], strides = [1, 1]} : vector<16x128xf32> to vector<1x128xf32>
    %73 = vector.broadcast %72 : vector<1x128xf32> to vector<32x128xf32>
    %74 = arith.mulf %73, %12 : vector<32x128xf32>
    %75 = arith.addf %71, %74 : vector<32x128xf32>
    %76 = vector.extract_strided_slice %21 {offsets = [6, 0], sizes = [1, 128], strides = [1, 1]} : vector<16x128xf32> to vector<1x128xf32>
    %77 = vector.broadcast %76 : vector<1x128xf32> to vector<32x128xf32>
    %78 = arith.mulf %77, %15 : vector<32x128xf32>
    %79 = arith.addf %75, %78 : vector<32x128xf32>
    %80 = arith.maximumf %60, %79 : vector<32x128xf32>
    %81 = vector.extract_strided_slice %21 {offsets = [3, 0], sizes = [1, 128], strides = [1, 1]} : vector<16x128xf32> to vector<1x128xf32>
    %82 = vector.broadcast %81 : vector<1x128xf32> to vector<32x128xf32>
    %83 = arith.mulf %82, %3 : vector<32x128xf32>
    %84 = vector.extract_strided_slice %21 {offsets = [4, 0], sizes = [1, 128], strides = [1, 1]} : vector<16x128xf32> to vector<1x128xf32>
    %85 = vector.broadcast %84 : vector<1x128xf32> to vector<32x128xf32>
    %86 = arith.mulf %85, %6 : vector<32x128xf32>
    %87 = arith.addf %83, %86 : vector<32x128xf32>
    %88 = vector.extract_strided_slice %21 {offsets = [5, 0], sizes = [1, 128], strides = [1, 1]} : vector<16x128xf32> to vector<1x128xf32>
    %89 = vector.broadcast %88 : vector<1x128xf32> to vector<32x128xf32>
    %90 = arith.mulf %89, %9 : vector<32x128xf32>
    %91 = arith.addf %87, %90 : vector<32x128xf32>
    %92 = vector.extract_strided_slice %21 {offsets = [6, 0], sizes = [1, 128], strides = [1, 1]} : vector<16x128xf32> to vector<1x128xf32>
    %93 = vector.broadcast %92 : vector<1x128xf32> to vector<32x128xf32>
    %94 = arith.mulf %93, %12 : vector<32x128xf32>
    %95 = arith.addf %91, %94 : vector<32x128xf32>
    %96 = vector.extract_strided_slice %21 {offsets = [7, 0], sizes = [1, 128], strides = [1, 1]} : vector<16x128xf32> to vector<1x128xf32>
    %97 = vector.broadcast %96 : vector<1x128xf32> to vector<32x128xf32>
    %98 = arith.mulf %97, %15 : vector<32x128xf32>
    %99 = arith.addf %95, %98 : vector<32x128xf32>
    %100 = arith.maximumf %80, %99 : vector<32x128xf32>
    %101 = vector.extract_strided_slice %21 {offsets = [4, 0], sizes = [1, 128], strides = [1, 1]} : vector<16x128xf32> to vector<1x128xf32>
    %102 = vector.broadcast %101 : vector<1x128xf32> to vector<32x128xf32>
    %103 = arith.mulf %102, %3 : vector<32x128xf32>
    %104 = vector.extract_strided_slice %21 {offsets = [5, 0], sizes = [1, 128], strides = [1, 1]} : vector<16x128xf32> to vector<1x128xf32>
    %105 = vector.broadcast %104 : vector<1x128xf32> to vector<32x128xf32>
    %106 = arith.mulf %105, %6 : vector<32x128xf32>
    %107 = arith.addf %103, %106 : vector<32x128xf32>
    %108 = vector.extract_strided_slice %21 {offsets = [6, 0], sizes = [1, 128], strides = [1, 1]} : vector<16x128xf32> to vector<1x128xf32>
    %109 = vector.broadcast %108 : vector<1x128xf32> to vector<32x128xf32>
    %110 = arith.mulf %109, %9 : vector<32x128xf32>
    %111 = arith.addf %107, %110 : vector<32x128xf32>
    %112 = vector.extract_strided_slice %21 {offsets = [7, 0], sizes = [1, 128], strides = [1, 1]} : vector<16x128xf32> to vector<1x128xf32>
    %113 = vector.broadcast %112 : vector<1x128xf32> to vector<32x128xf32>
    %114 = arith.mulf %113, %12 : vector<32x128xf32>
    %115 = arith.addf %111, %114 : vector<32x128xf32>
    %116 = vector.extract_strided_slice %21 {offsets = [8, 0], sizes = [1, 128], strides = [1, 1]} : vector<16x128xf32> to vector<1x128xf32>
    %117 = vector.broadcast %116 : vector<1x128xf32> to vector<32x128xf32>
    %118 = arith.mulf %117, %15 : vector<32x128xf32>
    %119 = arith.addf %115, %118 : vector<32x128xf32>
    %120 = arith.maximumf %100, %119 : vector<32x128xf32>
    %121 = vector.extract_strided_slice %21 {offsets = [5, 0], sizes = [1, 128], strides = [1, 1]} : vector<16x128xf32> to vector<1x128xf32>
    %122 = vector.broadcast %121 : vector<1x128xf32> to vector<32x128xf32>
    %123 = arith.mulf %122, %3 : vector<32x128xf32>
    %124 = vector.extract_strided_slice %21 {offsets = [6, 0], sizes = [1, 128], strides = [1, 1]} : vector<16x128xf32> to vector<1x128xf32>
    %125 = vector.broadcast %124 : vector<1x128xf32> to vector<32x128xf32>
    %126 = arith.mulf %125, %6 : vector<32x128xf32>
    %127 = arith.addf %123, %126 : vector<32x128xf32>
    %128 = vector.extract_strided_slice %21 {offsets = [7, 0], sizes = [1, 128], strides = [1, 1]} : vector<16x128xf32> to vector<1x128xf32>
    %129 = vector.broadcast %128 : vector<1x128xf32> to vector<32x128xf32>
    %130 = arith.mulf %129, %9 : vector<32x128xf32>
    %131 = arith.addf %127, %130 : vector<32x128xf32>
    %132 = vector.extract_strided_slice %21 {offsets = [8, 0], sizes = [1, 128], strides = [1, 1]} : vector<16x128xf32> to vector<1x128xf32>
    %133 = vector.broadcast %132 : vector<1x128xf32> to vector<32x128xf32>
    %134 = arith.mulf %133, %12 : vector<32x128xf32>
    %135 = arith.addf %131, %134 : vector<32x128xf32>
    %136 = vector.extract_strided_slice %21 {offsets = [9, 0], sizes = [1, 128], strides = [1, 1]} : vector<16x128xf32> to vector<1x128xf32>
    %137 = vector.broadcast %136 : vector<1x128xf32> to vector<32x128xf32>
    %138 = arith.mulf %137, %15 : vector<32x128xf32>
    %139 = arith.addf %135, %138 : vector<32x128xf32>
    %140 = arith.maximumf %120, %139 : vector<32x128xf32>
    %141 = vector.extract_strided_slice %21 {offsets = [6, 0], sizes = [1, 128], strides = [1, 1]} : vector<16x128xf32> to vector<1x128xf32>
    %142 = vector.broadcast %141 : vector<1x128xf32> to vector<32x128xf32>
    %143 = arith.mulf %142, %3 : vector<32x128xf32>
    %144 = vector.extract_strided_slice %21 {offsets = [7, 0], sizes = [1, 128], strides = [1, 1]} : vector<16x128xf32> to vector<1x128xf32>
    %145 = vector.broadcast %144 : vector<1x128xf32> to vector<32x128xf32>
    %146 = arith.mulf %145, %6 : vector<32x128xf32>
    %147 = arith.addf %143, %146 : vector<32x128xf32>
    %148 = vector.extract_strided_slice %21 {offsets = [8, 0], sizes = [1, 128], strides = [1, 1]} : vector<16x128xf32> to vector<1x128xf32>
    %149 = vector.broadcast %148 : vector<1x128xf32> to vector<32x128xf32>
    %150 = arith.mulf %149, %9 : vector<32x128xf32>
    %151 = arith.addf %147, %150 : vector<32x128xf32>
    %152 = vector.extract_strided_slice %21 {offsets = [9, 0], sizes = [1, 128], strides = [1, 1]} : vector<16x128xf32> to vector<1x128xf32>
    %153 = vector.broadcast %152 : vector<1x128xf32> to vector<32x128xf32>
    %154 = arith.mulf %153, %12 : vector<32x128xf32>
    %155 = arith.addf %151, %154 : vector<32x128xf32>
    %156 = vector.extract_strided_slice %21 {offsets = [10, 0], sizes = [1, 128], strides = [1, 1]} : vector<16x128xf32> to vector<1x128xf32>
    %157 = vector.broadcast %156 : vector<1x128xf32> to vector<32x128xf32>
    %158 = arith.mulf %157, %15 : vector<32x128xf32>
    %159 = arith.addf %155, %158 : vector<32x128xf32>
    %160 = arith.maximumf %140, %159 : vector<32x128xf32>
    %161 = vector.extract_strided_slice %21 {offsets = [7, 0], sizes = [1, 128], strides = [1, 1]} : vector<16x128xf32> to vector<1x128xf32>
    %162 = vector.broadcast %161 : vector<1x128xf32> to vector<32x128xf32>
    %163 = arith.mulf %162, %3 : vector<32x128xf32>
    %164 = vector.extract_strided_slice %21 {offsets = [8, 0], sizes = [1, 128], strides = [1, 1]} : vector<16x128xf32> to vector<1x128xf32>
    %165 = vector.broadcast %164 : vector<1x128xf32> to vector<32x128xf32>
    %166 = arith.mulf %165, %6 : vector<32x128xf32>
    %167 = arith.addf %163, %166 : vector<32x128xf32>
    %168 = vector.extract_strided_slice %21 {offsets = [9, 0], sizes = [1, 128], strides = [1, 1]} : vector<16x128xf32> to vector<1x128xf32>
    %169 = vector.broadcast %168 : vector<1x128xf32> to vector<32x128xf32>
    %170 = arith.mulf %169, %9 : vector<32x128xf32>
    %171 = arith.addf %167, %170 : vector<32x128xf32>
    %172 = vector.extract_strided_slice %21 {offsets = [10, 0], sizes = [1, 128], strides = [1, 1]} : vector<16x128xf32> to vector<1x128xf32>
    %173 = vector.broadcast %172 : vector<1x128xf32> to vector<32x128xf32>
    %174 = arith.mulf %173, %12 : vector<32x128xf32>
    %175 = arith.addf %171, %174 : vector<32x128xf32>
    %176 = vector.extract_strided_slice %21 {offsets = [11, 0], sizes = [1, 128], strides = [1, 1]} : vector<16x128xf32> to vector<1x128xf32>
    %177 = vector.broadcast %176 : vector<1x128xf32> to vector<32x128xf32>
    %178 = arith.mulf %177, %15 : vector<32x128xf32>
    %179 = arith.addf %175, %178 : vector<32x128xf32>
    %180 = arith.maximumf %160, %179 : vector<32x128xf32>
    %181 = vector.extract_strided_slice %21 {offsets = [8, 0], sizes = [1, 128], strides = [1, 1]} : vector<16x128xf32> to vector<1x128xf32>
    %182 = vector.broadcast %181 : vector<1x128xf32> to vector<32x128xf32>
    %183 = arith.mulf %182, %3 : vector<32x128xf32>
    %184 = vector.extract_strided_slice %21 {offsets = [9, 0], sizes = [1, 128], strides = [1, 1]} : vector<16x128xf32> to vector<1x128xf32>
    %185 = vector.broadcast %184 : vector<1x128xf32> to vector<32x128xf32>
    %186 = arith.mulf %185, %6 : vector<32x128xf32>
    %187 = arith.addf %183, %186 : vector<32x128xf32>
    %188 = vector.extract_strided_slice %21 {offsets = [10, 0], sizes = [1, 128], strides = [1, 1]} : vector<16x128xf32> to vector<1x128xf32>
    %189 = vector.broadcast %188 : vector<1x128xf32> to vector<32x128xf32>
    %190 = arith.mulf %189, %9 : vector<32x128xf32>
    %191 = arith.addf %187, %190 : vector<32x128xf32>
    %192 = vector.extract_strided_slice %21 {offsets = [11, 0], sizes = [1, 128], strides = [1, 1]} : vector<16x128xf32> to vector<1x128xf32>
    %193 = vector.broadcast %192 : vector<1x128xf32> to vector<32x128xf32>
    %194 = arith.mulf %193, %12 : vector<32x128xf32>
    %195 = arith.addf %191, %194 : vector<32x128xf32>
    %196 = vector.extract_strided_slice %21 {offsets = [12, 0], sizes = [1, 128], strides = [1, 1]} : vector<16x128xf32> to vector<1x128xf32>
    %197 = vector.broadcast %196 : vector<1x128xf32> to vector<32x128xf32>
    %198 = arith.mulf %197, %15 : vector<32x128xf32>
    %199 = arith.addf %195, %198 : vector<32x128xf32>
    %200 = arith.maximumf %180, %199 : vector<32x128xf32>
    %201 = vector.extract_strided_slice %21 {offsets = [9, 0], sizes = [1, 128], strides = [1, 1]} : vector<16x128xf32> to vector<1x128xf32>
    %202 = vector.broadcast %201 : vector<1x128xf32> to vector<32x128xf32>
    %203 = arith.mulf %202, %3 : vector<32x128xf32>
    %204 = vector.extract_strided_slice %21 {offsets = [10, 0], sizes = [1, 128], strides = [1, 1]} : vector<16x128xf32> to vector<1x128xf32>
    %205 = vector.broadcast %204 : vector<1x128xf32> to vector<32x128xf32>
    %206 = arith.mulf %205, %6 : vector<32x128xf32>
    %207 = arith.addf %203, %206 : vector<32x128xf32>
    %208 = vector.extract_strided_slice %21 {offsets = [11, 0], sizes = [1, 128], strides = [1, 1]} : vector<16x128xf32> to vector<1x128xf32>
    %209 = vector.broadcast %208 : vector<1x128xf32> to vector<32x128xf32>
    %210 = arith.mulf %209, %9 : vector<32x128xf32>
    %211 = arith.addf %207, %210 : vector<32x128xf32>
    %212 = vector.extract_strided_slice %21 {offsets = [12, 0], sizes = [1, 128], strides = [1, 1]} : vector<16x128xf32> to vector<1x128xf32>
    %213 = vector.broadcast %212 : vector<1x128xf32> to vector<32x128xf32>
    %214 = arith.mulf %213, %12 : vector<32x128xf32>
    %215 = arith.addf %211, %214 : vector<32x128xf32>
    %216 = vector.extract_strided_slice %21 {offsets = [13, 0], sizes = [1, 128], strides = [1, 1]} : vector<16x128xf32> to vector<1x128xf32>
    %217 = vector.broadcast %216 : vector<1x128xf32> to vector<32x128xf32>
    %218 = arith.mulf %217, %15 : vector<32x128xf32>
    %219 = arith.addf %215, %218 : vector<32x128xf32>
    %220 = arith.maximumf %200, %219 : vector<32x128xf32>
    %221 = vector.extract_strided_slice %21 {offsets = [10, 0], sizes = [1, 128], strides = [1, 1]} : vector<16x128xf32> to vector<1x128xf32>
    %222 = vector.broadcast %221 : vector<1x128xf32> to vector<32x128xf32>
    %223 = arith.mulf %222, %3 : vector<32x128xf32>
    %224 = vector.extract_strided_slice %21 {offsets = [11, 0], sizes = [1, 128], strides = [1, 1]} : vector<16x128xf32> to vector<1x128xf32>
    %225 = vector.broadcast %224 : vector<1x128xf32> to vector<32x128xf32>
    %226 = arith.mulf %225, %6 : vector<32x128xf32>
    %227 = arith.addf %223, %226 : vector<32x128xf32>
    %228 = vector.extract_strided_slice %21 {offsets = [12, 0], sizes = [1, 128], strides = [1, 1]} : vector<16x128xf32> to vector<1x128xf32>
    %229 = vector.broadcast %228 : vector<1x128xf32> to vector<32x128xf32>
    %230 = arith.mulf %229, %9 : vector<32x128xf32>
    %231 = arith.addf %227, %230 : vector<32x128xf32>
    %232 = vector.extract_strided_slice %21 {offsets = [13, 0], sizes = [1, 128], strides = [1, 1]} : vector<16x128xf32> to vector<1x128xf32>
    %233 = vector.broadcast %232 : vector<1x128xf32> to vector<32x128xf32>
    %234 = arith.mulf %233, %12 : vector<32x128xf32>
    %235 = arith.addf %231, %234 : vector<32x128xf32>
    %236 = vector.extract_strided_slice %21 {offsets = [14, 0], sizes = [1, 128], strides = [1, 1]} : vector<16x128xf32> to vector<1x128xf32>
    %237 = vector.broadcast %236 : vector<1x128xf32> to vector<32x128xf32>
    %238 = arith.mulf %237, %15 : vector<32x128xf32>
    %239 = arith.addf %235, %238 : vector<32x128xf32>
    %240 = arith.maximumf %220, %239 : vector<32x128xf32>
    %241 = vector.extract_strided_slice %21 {offsets = [11, 0], sizes = [1, 128], strides = [1, 1]} : vector<16x128xf32> to vector<1x128xf32>
    %242 = vector.broadcast %241 : vector<1x128xf32> to vector<32x128xf32>
    %243 = arith.mulf %242, %3 : vector<32x128xf32>
    %244 = vector.extract_strided_slice %21 {offsets = [12, 0], sizes = [1, 128], strides = [1, 1]} : vector<16x128xf32> to vector<1x128xf32>
    %245 = vector.broadcast %244 : vector<1x128xf32> to vector<32x128xf32>
    %246 = arith.mulf %245, %6 : vector<32x128xf32>
    %247 = arith.addf %243, %246 : vector<32x128xf32>
    %248 = vector.extract_strided_slice %21 {offsets = [13, 0], sizes = [1, 128], strides = [1, 1]} : vector<16x128xf32> to vector<1x128xf32>
    %249 = vector.broadcast %248 : vector<1x128xf32> to vector<32x128xf32>
    %250 = arith.mulf %249, %9 : vector<32x128xf32>
    %251 = arith.addf %247, %250 : vector<32x128xf32>
    %252 = vector.extract_strided_slice %21 {offsets = [14, 0], sizes = [1, 128], strides = [1, 1]} : vector<16x128xf32> to vector<1x128xf32>
    %253 = vector.broadcast %252 : vector<1x128xf32> to vector<32x128xf32>
    %254 = arith.mulf %253, %12 : vector<32x128xf32>
    %255 = arith.addf %251, %254 : vector<32x128xf32>
    %256 = vector.extract_strided_slice %21 {offsets = [15, 0], sizes = [1, 128], strides = [1, 1]} : vector<16x128xf32> to vector<1x128xf32>
    %257 = vector.broadcast %256 : vector<1x128xf32> to vector<32x128xf32>
    %258 = arith.mulf %257, %15 : vector<32x128xf32>
    %259 = arith.addf %255, %258 : vector<32x128xf32>
    %260 = arith.maximumf %240, %259 : vector<32x128xf32>
    %261 = arith.addf %260, %18 : vector<32x128xf32>
    %cst = arith.constant 0.000000e+00 : f32
    %262 = vector.broadcast %cst : f32 to vector<32x128xf32>
    %263 = arith.maximumf %261, %262 : vector<32x128xf32>
    %264 = arith.index_cast %c0_i32 : i32 to index
    %c0_5 = arith.constant 0 : index
    %c0_6 = arith.constant 0 : index
    %265 = vector.load %arg4[%264, %c0_5, %c0_6] : memref<1x32x128xf32, #tpu.memory_space<vmem>>, vector<1x32x128xf32>
    %266 = vector.shape_cast %265 : vector<1x32x128xf32> to vector<32x128xf32>
    %267 = vector.shape_cast %263 : vector<32x128xf32> to vector<1x32x128xf32>
    tpu.vector_store %arg4[%264, %c0_5, %c0_6], %267 {strides = array<i32>} : memref<1x32x128xf32, #tpu.memory_space<vmem>>, vector<1x32x128xf32>,
    %c1_i32 = arith.constant 1 : i32
    return
  }
  func.func @transform_0(%arg0: i32) -> (i32, i32, i32) {
    %c0_i32 = arith.constant 0 : i32
    %c0_i32_0 = arith.constant 0 : i32
    %c0_i32_1 = arith.constant 0 : i32
    return %arg0, %c0_i32, %c0_i32_0 : i32, i32, i32
  }
  func.func @transform_1(%arg0: i32) -> (i32, i32) {
    %c0_i32 = arith.constant 0 : i32
    %c0_i32_0 = arith.constant 0 : i32
    %c0_i32_1 = arith.constant 0 : i32
    return %c0_i32, %c0_i32_0 : i32, i32
  }
  func.func @transform_2(%arg0: i32) -> (i32, i32) {
    %c0_i32 = arith.constant 0 : i32
    %c0_i32_0 = arith.constant 0 : i32
    %c0_i32_1 = arith.constant 0 : i32
    return %c0_i32, %c0_i32_0 : i32, i32
  }
  func.func @transform_3(%arg0: i32) -> (i32, i32, i32) {
    %c0_i32 = arith.constant 0 : i32
    %c0_i32_0 = arith.constant 0 : i32
    %c0_i32_1 = arith.constant 0 : i32
    return %arg0, %c0_i32, %c0_i32_0 : i32, i32, i32
  }
}

</mosaic_0001>

<llo_original>
// kernel: tpu_custom_call.1
$region0: #{tpu_custom_call.1}
  #allocation0 [shape = 'u32[]', space=smem, size = 0x4, offset = 0x4, fixed_abs, tag = 'smem constant byte address 0x4 - core index']
  #allocation1 [shape = 'u32[144,128]{1,0:T(1,128)}', space=vmem, size = 0x12000, scoped, tag = 'internal scratch']
  %s0 = inlined_call_operand.vmem [shape: f32[1,16,128], index: 0, kind: input, shape index: {}]
  %s1 = inlined_call_operand.vmem [shape: f32[32,5], index: 1, kind: input, shape index: {}]
  %s2 = inlined_call_operand.vmem [shape: f32[32,1], index: 2, kind: input, shape index: {}]
  %s3 = inlined_call_operand.hbm [shape: f32[1,32,128], index: 3, kind: output, shape index: {}]
  %s4 = sld [smem:[#allocation0]]
  $region22: #{tpu_custom_call.1} parent=0
    _
  %s6 = ssub.s32 1, %s4
  %s7 = scalar_select 0, %s6, %s4
  $region1: #{tpu_custom_call.1} parent=0
    #allocation2 [shape = 'u8[16384]{0}', space=vmem, size = 0x4000, scoped, tag = 'output window, operand 0, single buffered']
    #allocation3 [shape = 's32[1]{0}', space=sflag, size = 0x4, scoped, tag = 'scoped memory for tpu_custom_call.1']
    %8 = vsyncpa [#allocation3], 0
    // Predicated region
    $region2: #{tpu_custom_call.1} parent=1 // pred_check
      _
    $region3: #{tpu_custom_call.1} parent=1 // pred_check_branch
      %10 = sbr.rel (0) target = $region5
    $region4: #{tpu_custom_call.1} parent=1 // pred_region
      _
    $region5: #{tpu_custom_call.1} parent=1 // pred_fallthru
      _
    // Predicated region
    $region6: #{tpu_custom_call.1} parent=1 // pred_check
      _
    $region7: #{tpu_custom_call.1} parent=1 // pred_check_branch
      %12 = sbr.rel (0) target = $region9
    $region8: #{tpu_custom_call.1} parent=1 // pred_region
      _
    $region9: #{tpu_custom_call.1} parent=1 // pred_fallthru
      _
    // Predicated region
    $region10: #{tpu_custom_call.1} parent=1 // pred_check
      _
    $region11: #{tpu_custom_call.1} parent=1 // pred_check_branch
      %14 = sbr.rel (0) target = $region13
    $region12: #{tpu_custom_call.1} parent=1 // pred_region
      _
    $region13: #{tpu_custom_call.1} parent=1 // pred_fallthru
      _
    %v15 = vld [vmem:[%s1] sm:$0xff]
    %v16 = vld [vmem:[%s1 + $0x8] sm:$0xff]
    %v17 = vld [vmem:[%s1 + $0x10] sm:$0xff]
    %v18 = vld [vmem:[%s1 + $0x18] sm:$0xff]
    %20 = vset.pattern.permute.xlu0 0
    %21 = vperm.xlu0 %20, %v15
    %v22 = vpop.permute.xlu0 %21
    %25 = vset.pattern.permute.xlu0 0
    %26 = vperm.xlu0 %25, %v16
    %v27 = vpop.permute.xlu0 %26
    %30 = vset.pattern.permute.xlu0 0
    %31 = vperm.xlu0 %30, %v17
    %v32 = vpop.permute.xlu0 %31
    %35 = vset.pattern.permute.xlu0 0
    %36 = vperm.xlu0 %35, %v18
    %v37 = vpop.permute.xlu0 %36
    %39 = vset.pattern.permute.xlu0 1
    %40 = vperm.xlu0 %39, %v15
    %v41 = vpop.permute.xlu0 %40
    %43 = vset.pattern.permute.xlu0 1
    %44 = vperm.xlu0 %43, %v16
    %v45 = vpop.permute.xlu0 %44
    %47 = vset.pattern.permute.xlu0 1
    %48 = vperm.xlu0 %47, %v17
    %v49 = vpop.permute.xlu0 %48
    %51 = vset.pattern.permute.xlu0 1
    %52 = vperm.xlu0 %51, %v18
    %v53 = vpop.permute.xlu0 %52
    %55 = vset.pattern.permute.xlu0 2
    %56 = vperm.xlu0 %55, %v15
    %v57 = vpop.permute.xlu0 %56
    %59 = vset.pattern.permute.xlu0 2
    %60 = vperm.xlu0 %59, %v16
    %v61 = vpop.permute.xlu0 %60
    %63 = vset.pattern.permute.xlu0 2
    %64 = vperm.xlu0 %63, %v17
    %v65 = vpop.permute.xlu0 %64
    %67 = vset.pattern.permute.xlu0 2
    %68 = vperm.xlu0 %67, %v18
    %v69 = vpop.permute.xlu0 %68
    %71 = vset.pattern.permute.xlu0 3
    %72 = vperm.xlu0 %71, %v15
    %v73 = vpop.permute.xlu0 %72
    %75 = vset.pattern.permute.xlu0 3
    %76 = vperm.xlu0 %75, %v16
    %v77 = vpop.permute.xlu0 %76
    %79 = vset.pattern.permute.xlu0 3
    %80 = vperm.xlu0 %79, %v17
    %v81 = vpop.permute.xlu0 %80
    %83 = vset.pattern.permute.xlu0 3
    %84 = vperm.xlu0 %83, %v18
    %v85 = vpop.permute.xlu0 %84
    %87 = vset.pattern.permute.xlu0 4
    %88 = vperm.xlu0 %87, %v15
    %v89 = vpop.permute.xlu0 %88
    %91 = vset.pattern.permute.xlu0 4
    %92 = vperm.xlu0 %91, %v16
    %v93 = vpop.permute.xlu0 %92
    %95 = vset.pattern.permute.xlu0 4
    %96 = vperm.xlu0 %95, %v17
    %v97 = vpop.permute.xlu0 %96
    %99 = vset.pattern.permute.xlu0 4
    %100 = vperm.xlu0 %99, %v18
    %v101 = vpop.permute.xlu0 %100
    %v103 = vld [vmem:[%s2] sm:$0xff]
    %v104 = vld [vmem:[%s2 + $0x8] sm:$0xff]
    %v105 = vld [vmem:[%s2 + $0x10] sm:$0xff]
    %v106 = vld [vmem:[%s2 + $0x18] sm:$0xff]
    %108 = vset.pattern.permute.xlu0 0
    %109 = vperm.xlu0 %108, %v103
    %v110 = vpop.permute.xlu0 %109
    %113 = vset.pattern.permute.xlu0 0
    %114 = vperm.xlu0 %113, %v104
    %v115 = vpop.permute.xlu0 %114
    %118 = vset.pattern.permute.xlu0 0
    %119 = vperm.xlu0 %118, %v105
    %v120 = vpop.permute.xlu0 %119
    %123 = vset.pattern.permute.xlu0 0
    %124 = vperm.xlu0 %123, %v106
    %v125 = vpop.permute.xlu0 %124
    %v127 = vld [vmem:[%s0] sm:$0xff]
    %v128 = vld [vmem:[%s0 + $0x8] sm:$0xff]
    %v129 = vlaneseq
    %v130 = vshrl.u32 %v129, 7
    %v131 = vsub.s32 0, %v130
    %v132 = vrot.slane %v127, %v131
    %v133 = vmul.f32 %v132, %v22
    %v134 = vmul.f32 %v132, %v27
    %v135 = vmul.f32 %v132, %v32
    %v136 = vmul.f32 %v132, %v37
    %v137 = vlaneseq
    %v138 = vshrl.u32 %v137, 7
    %v139 = vsub.s32 1, %v138
    %v140 = vrot.slane %v127, %v139
    %v141 = vmul.f32 %v140, %v41
    %v142 = vmul.f32 %v140, %v45
    %v143 = vmul.f32 %v140, %v49
    %v144 = vmul.f32 %v140, %v53
    %v145 = vadd.f32 %v133, %v141
    %v146 = vadd.f32 %v134, %v142
    %v147 = vadd.f32 %v135, %v143
    %v148 = vadd.f32 %v136, %v144
    %v149 = vlaneseq
    %v150 = vshrl.u32 %v149, 7
    %v151 = vsub.s32 2, %v150
    %v152 = vrot.slane %v127, %v151
    %v153 = vmul.f32 %v152, %v57
    %v154 = vmul.f32 %v152, %v61
    %v155 = vmul.f32 %v152, %v65
    %v156 = vmul.f32 %v152, %v69
    %v157 = vadd.f32 %v145, %v153
    %v158 = vadd.f32 %v146, %v154
    %v159 = vadd.f32 %v147, %v155
    %v160 = vadd.f32 %v148, %v156
    %v161 = vlaneseq
    %v162 = vshrl.u32 %v161, 7
    %v163 = vsub.s32 3, %v162
    %v164 = vrot.slane %v127, %v163
    %v165 = vmul.f32 %v164, %v73
    %v166 = vmul.f32 %v164, %v77
    %v167 = vmul.f32 %v164, %v81
    %v168 = vmul.f32 %v164, %v85
    %v169 = vadd.f32 %v157, %v165
    %v170 = vadd.f32 %v158, %v166
    %v171 = vadd.f32 %v159, %v167
    %v172 = vadd.f32 %v160, %v168
    %v173 = vlaneseq
    %v174 = vshrl.u32 %v173, 7
    %v175 = vsub.s32 4, %v174
    %v176 = vrot.slane %v127, %v175
    %v177 = vmul.f32 %v176, %v89
    %v178 = vmul.f32 %v176, %v93
    %v179 = vmul.f32 %v176, %v97
    %v180 = vmul.f32 %v176, %v101
    %v181 = vadd.f32 %v169, %v177
    %v182 = vadd.f32 %v170, %v178
    %v183 = vadd.f32 %v171, %v179
    %v184 = vadd.f32 %v172, %v180
    %v185 = vmul.f32 %v140, %v22
    %v186 = vmul.f32 %v140, %v27
    %v187 = vmul.f32 %v140, %v32
    %v188 = vmul.f32 %v140, %v37
    %v189 = vmul.f32 %v152, %v41
    %v190 = vmul.f32 %v152, %v45
    %v191 = vmul.f32 %v152, %v49
    %v192 = vmul.f32 %v152, %v53
    %v193 = vadd.f32 %v185, %v189
    %v194 = vadd.f32 %v186, %v190
    %v195 = vadd.f32 %v187, %v191
    %v196 = vadd.f32 %v188, %v192
    %v197 = vmul.f32 %v164, %v57
    %v198 = vmul.f32 %v164, %v61
    %v199 = vmul.f32 %v164, %v65
    %v200 = vmul.f32 %v164, %v69
    %v201 = vadd.f32 %v193, %v197
    %v202 = vadd.f32 %v194, %v198
    %v203 = vadd.f32 %v195, %v199
    %v204 = vadd.f32 %v196, %v200
    %v205 = vmul.f32 %v176, %v73
    %v206 = vmul.f32 %v176, %v77
    %v207 = vmul.f32 %v176, %v81
    %v208 = vmul.f32 %v176, %v85
    %v209 = vadd.f32 %v201, %v205
    %v210 = vadd.f32 %v202, %v206
    %v211 = vadd.f32 %v203, %v207
    %v212 = vadd.f32 %v204, %v208
    %v213 = vlaneseq
    %v214 = vshrl.u32 %v213, 7
    %v215 = vsub.s32 5, %v214
    %v216 = vrot.slane %v127, %v215
    %v217 = vmul.f32 %v216, %v89
    %v218 = vmul.f32 %v216, %v93
    %v219 = vmul.f32 %v216, %v97
    %v220 = vmul.f32 %v216, %v101
    %v221 = vadd.f32 %v209, %v217
    %v222 = vadd.f32 %v210, %v218
    %v223 = vadd.f32 %v211, %v219
    %v224 = vadd.f32 %v212, %v220
    %v225 = vmax.f32 %v181, %v221
    %v226 = vmax.f32 %v182, %v222
    %v227 = vmax.f32 %v183, %v223
    %v228 = vmax.f32 %v184, %v224
    %v229 = vmul.f32 %v152, %v22
    %v230 = vmul.f32 %v152, %v27
    %v231 = vmul.f32 %v152, %v32
    %v232 = vmul.f32 %v152, %v37
    %v233 = vmul.f32 %v164, %v41
    %v234 = vmul.f32 %v164, %v45
    %v235 = vmul.f32 %v164, %v49
    %v236 = vmul.f32 %v164, %v53
    %v237 = vadd.f32 %v229, %v233
    %v238 = vadd.f32 %v230, %v234
    %v239 = vadd.f32 %v231, %v235
    %v240 = vadd.f32 %v232, %v236
    %v241 = vmul.f32 %v176, %v57
    %v242 = vmul.f32 %v176, %v61
    %v243 = vmul.f32 %v176, %v65
    %v244 = vmul.f32 %v176, %v69
    %v245 = vadd.f32 %v237, %v241
    %v246 = vadd.f32 %v238, %v242
    %v247 = vadd.f32 %v239, %v243
    %v248 = vadd.f32 %v240, %v244
    %v249 = vmul.f32 %v216, %v73
    %v250 = vmul.f32 %v216, %v77
    %v251 = vmul.f32 %v216, %v81
    %v252 = vmul.f32 %v216, %v85
    %v253 = vadd.f32 %v245, %v249
    %v254 = vadd.f32 %v246, %v250
    %v255 = vadd.f32 %v247, %v251
    %v256 = vadd.f32 %v248, %v252
    %v257 = vlaneseq
    %v258 = vshrl.u32 %v257, 7
    %v259 = vsub.s32 6, %v258
    %v260 = vrot.slane %v127, %v259
    %v261 = vmul.f32 %v260, %v89
    %v262 = vmul.f32 %v260, %v93
    %v263 = vmul.f32 %v260, %v97
    %v264 = vmul.f32 %v260, %v101
    %v265 = vadd.f32 %v253, %v261
    %v266 = vadd.f32 %v254, %v262
    %v267 = vadd.f32 %v255, %v263
    %v268 = vadd.f32 %v256, %v264
    %v269 = vmax.f32 %v225, %v265
    %v270 = vmax.f32 %v226, %v266
    %v271 = vmax.f32 %v227, %v267
    %v272 = vmax.f32 %v228, %v268
    %v273 = vmul.f32 %v164, %v22
    %v274 = vmul.f32 %v164, %v27
    %v275 = vmul.f32 %v164, %v32
    %v276 = vmul.f32 %v164, %v37
    %v277 = vmul.f32 %v176, %v41
    %v278 = vmul.f32 %v176, %v45
    %v279 = vmul.f32 %v176, %v49
    %v280 = vmul.f32 %v176, %v53
    %v281 = vadd.f32 %v273, %v277
    %v282 = vadd.f32 %v274, %v278
    %v283 = vadd.f32 %v275, %v279
    %v284 = vadd.f32 %v276, %v280
    %v285 = vmul.f32 %v216, %v57
    %v286 = vmul.f32 %v216, %v61
    %v287 = vmul.f32 %v216, %v65
    %v288 = vmul.f32 %v216, %v69
    %v289 = vadd.f32 %v281, %v285
    %v290 = vadd.f32 %v282, %v286
    %v291 = vadd.f32 %v283, %v287
    %v292 = vadd.f32 %v284, %v288
    %v293 = vmul.f32 %v260, %v73
    %v294 = vmul.f32 %v260, %v77
    %v295 = vmul.f32 %v260, %v81
    %v296 = vmul.f32 %v260, %v85
    %v297 = vadd.f32 %v289, %v293
    %v298 = vadd.f32 %v290, %v294
    %v299 = vadd.f32 %v291, %v295
    %v300 = vadd.f32 %v292, %v296
    %v301 = vlaneseq
    %v302 = vshrl.u32 %v301, 7
    %v303 = vsub.s32 7, %v302
    %v304 = vrot.slane %v127, %v303
    %v305 = vmul.f32 %v304, %v89
    %v306 = vmul.f32 %v304, %v93
    %v307 = vmul.f32 %v304, %v97
    %v308 = vmul.f32 %v304, %v101
    %v309 = vadd.f32 %v297, %v305
    %v310 = vadd.f32 %v298, %v306
    %v311 = vadd.f32 %v299, %v307
    %v312 = vadd.f32 %v300, %v308
    %v313 = vmax.f32 %v269, %v309
    %v314 = vmax.f32 %v270, %v310
    %v315 = vmax.f32 %v271, %v311
    %v316 = vmax.f32 %v272, %v312
    %v317 = vmul.f32 %v176, %v22
    %v318 = vmul.f32 %v176, %v27
    %v319 = vmul.f32 %v176, %v32
    %v320 = vmul.f32 %v176, %v37
    %v321 = vmul.f32 %v216, %v41
    %v322 = vmul.f32 %v216, %v45
    %v323 = vmul.f32 %v216, %v49
    %v324 = vmul.f32 %v216, %v53
    %v325 = vadd.f32 %v317, %v321
    %v326 = vadd.f32 %v318, %v322
    %v327 = vadd.f32 %v319, %v323
    %v328 = vadd.f32 %v320, %v324
    %v329 = vmul.f32 %v260, %v57
    %v330 = vmul.f32 %v260, %v61
    %v331 = vmul.f32 %v260, %v65
    %v332 = vmul.f32 %v260, %v69
    %v333 = vadd.f32 %v325, %v329
    %v334 = vadd.f32 %v326, %v330
    %v335 = vadd.f32 %v327, %v331
    %v336 = vadd.f32 %v328, %v332
    %v337 = vmul.f32 %v304, %v73
    %v338 = vmul.f32 %v304, %v77
    %v339 = vmul.f32 %v304, %v81
    %v340 = vmul.f32 %v304, %v85
    %v341 = vadd.f32 %v333, %v337
    %v342 = vadd.f32 %v334, %v338
    %v343 = vadd.f32 %v335, %v339
    %v344 = vadd.f32 %v336, %v340
    %v345 = vlaneseq
    %v346 = vshrl.u32 %v345, 7
    %v347 = vsub.s32 0, %v346
    %v348 = vrot.slane %v128, %v347
    %v349 = vmul.f32 %v348, %v89
    %v350 = vmul.f32 %v348, %v93
    %v351 = vmul.f32 %v348, %v97
    %v352 = vmul.f32 %v348, %v101
    %v353 = vadd.f32 %v341, %v349
    %v354 = vadd.f32 %v342, %v350
    %v355 = vadd.f32 %v343, %v351
    %v356 = vadd.f32 %v344, %v352
    %v357 = vmax.f32 %v313, %v353
    %v358 = vmax.f32 %v314, %v354
    %v359 = vmax.f32 %v315, %v355
    %v360 = vmax.f32 %v316, %v356
    %v361 = vmul.f32 %v216, %v22
    %v362 = vmul.f32 %v216, %v27
    %v363 = vmul.f32 %v216, %v32
    %v364 = vmul.f32 %v216, %v37
    %v365 = vmul.f32 %v260, %v41
    %v366 = vmul.f32 %v260, %v45
    %v367 = vmul.f32 %v260, %v49
    %v368 = vmul.f32 %v260, %v53
    %v369 = vadd.f32 %v361, %v365
    %v370 = vadd.f32 %v362, %v366
    %v371 = vadd.f32 %v363, %v367
    %v372 = vadd.f32 %v364, %v368
    %v373 = vmul.f32 %v304, %v57
    %v374 = vmul.f32 %v304, %v61
    %v375 = vmul.f32 %v304, %v65
    %v376 = vmul.f32 %v304, %v69
    %v377 = vadd.f32 %v369, %v373
    %v378 = vadd.f32 %v370, %v374
    %v379 = vadd.f32 %v371, %v375
    %v380 = vadd.f32 %v372, %v376
    %v381 = vmul.f32 %v348, %v73
    %v382 = vmul.f32 %v348, %v77
    %v383 = vmul.f32 %v348, %v81
    %v384 = vmul.f32 %v348, %v85
    %v385 = vadd.f32 %v377, %v381
    %v386 = vadd.f32 %v378, %v382
    %v387 = vadd.f32 %v379, %v383
    %v388 = vadd.f32 %v380, %v384
    %v389 = vlaneseq
    %v390 = vshrl.u32 %v389, 7
    %v391 = vsub.s32 1, %v390
    %v392 = vrot.slane %v128, %v391
    %v393 = vmul.f32 %v392, %v89
    %v394 = vmul.f32 %v392, %v93
    %v395 = vmul.f32 %v392, %v97
    %v396 = vmul.f32 %v392, %v101
    %v397 = vadd.f32 %v385, %v393
    %v398 = vadd.f32 %v386, %v394
    %v399 = vadd.f32 %v387, %v395
    %v400 = vadd.f32 %v388, %v396
    %v401 = vmax.f32 %v357, %v397
    %v402 = vmax.f32 %v358, %v398
    %v403 = vmax.f32 %v359, %v399
    %v404 = vmax.f32 %v360, %v400
    %v405 = vmul.f32 %v260, %v22
    %v406 = vmul.f32 %v260, %v27
    %v407 = vmul.f32 %v260, %v32
    %v408 = vmul.f32 %v260, %v37
    %v409 = vmul.f32 %v304, %v41
    %v410 = vmul.f32 %v304, %v45
    %v411 = vmul.f32 %v304, %v49
    %v412 = vmul.f32 %v304, %v53
    %v413 = vadd.f32 %v405, %v409
    %v414 = vadd.f32 %v406, %v410
    %v415 = vadd.f32 %v407, %v411
    %v416 = vadd.f32 %v408, %v412
    %v417 = vmul.f32 %v348, %v57
    %v418 = vmul.f32 %v348, %v61
    %v419 = vmul.f32 %v348, %v65
    %v420 = vmul.f32 %v348, %v69
    %v421 = vadd.f32 %v413, %v417
    %v422 = vadd.f32 %v414, %v418
    %v423 = vadd.f32 %v415, %v419
    %v424 = vadd.f32 %v416, %v420
    %v425 = vmul.f32 %v392, %v73
    %v426 = vmul.f32 %v392, %v77
    %v427 = vmul.f32 %v392, %v81
    %v428 = vmul.f32 %v392, %v85
    %v429 = vadd.f32 %v421, %v425
    %v430 = vadd.f32 %v422, %v426
    %v431 = vadd.f32 %v423, %v427
    %v432 = vadd.f32 %v424, %v428
    %v433 = vlaneseq
    %v434 = vshrl.u32 %v433, 7
    %v435 = vsub.s32 2, %v434
    %v436 = vrot.slane %v128, %v435
    %v437 = vmul.f32 %v436, %v89
    %v438 = vmul.f32 %v436, %v93
    %v439 = vmul.f32 %v436, %v97
    %v440 = vmul.f32 %v436, %v101
    %v441 = vadd.f32 %v429, %v437
    %v442 = vadd.f32 %v430, %v438
    %v443 = vadd.f32 %v431, %v439
    %v444 = vadd.f32 %v432, %v440
    %v445 = vmax.f32 %v401, %v441
    %v446 = vmax.f32 %v402, %v442
    %v447 = vmax.f32 %v403, %v443
    %v448 = vmax.f32 %v404, %v444
    %v449 = vmul.f32 %v304, %v22
    %v450 = vmul.f32 %v304, %v27
    %v451 = vmul.f32 %v304, %v32
    %v452 = vmul.f32 %v304, %v37
    %v453 = vmul.f32 %v348, %v41
    %v454 = vmul.f32 %v348, %v45
    %v455 = vmul.f32 %v348, %v49
    %v456 = vmul.f32 %v348, %v53
    %v457 = vadd.f32 %v449, %v453
    %v458 = vadd.f32 %v450, %v454
    %v459 = vadd.f32 %v451, %v455
    %v460 = vadd.f32 %v452, %v456
    %v461 = vmul.f32 %v392, %v57
    %v462 = vmul.f32 %v392, %v61
    %v463 = vmul.f32 %v392, %v65
    %v464 = vmul.f32 %v392, %v69
    %v465 = vadd.f32 %v457, %v461
    %v466 = vadd.f32 %v458, %v462
    %v467 = vadd.f32 %v459, %v463
    %v468 = vadd.f32 %v460, %v464
    %v469 = vmul.f32 %v436, %v73
    %v470 = vmul.f32 %v436, %v77
    %v471 = vmul.f32 %v436, %v81
    %v472 = vmul.f32 %v436, %v85
    %v473 = vadd.f32 %v465, %v469
    %v474 = vadd.f32 %v466, %v470
    %v475 = vadd.f32 %v467, %v471
    %v476 = vadd.f32 %v468, %v472
    %v477 = vlaneseq
    %v478 = vshrl.u32 %v477, 7
    %v479 = vsub.s32 3, %v478
    %v480 = vrot.slane %v128, %v479
    %v481 = vmul.f32 %v480, %v89
    %v482 = vmul.f32 %v480, %v93
    %v483 = vmul.f32 %v480, %v97
    %v484 = vmul.f32 %v480, %v101
    %v485 = vadd.f32 %v473, %v481
    %v486 = vadd.f32 %v474, %v482
    %v487 = vadd.f32 %v475, %v483
    %v488 = vadd.f32 %v476, %v484
    %v489 = vmax.f32 %v445, %v485
    %v490 = vmax.f32 %v446, %v486
    %v491 = vmax.f32 %v447, %v487
    %v492 = vmax.f32 %v448, %v488
    %v493 = vmul.f32 %v348, %v22
    %v494 = vmul.f32 %v348, %v27
    %v495 = vmul.f32 %v348, %v32
    %v496 = vmul.f32 %v348, %v37
    %v497 = vmul.f32 %v392, %v41
    %v498 = vmul.f32 %v392, %v45
    %v499 = vmul.f32 %v392, %v49
    %v500 = vmul.f32 %v392, %v53
    %v501 = vadd.f32 %v493, %v497
    %v502 = vadd.f32 %v494, %v498
    %v503 = vadd.f32 %v495, %v499
    %v504 = vadd.f32 %v496, %v500
    %v505 = vmul.f32 %v436, %v57
    %v506 = vmul.f32 %v436, %v61
    %v507 = vmul.f32 %v436, %v65
    %v508 = vmul.f32 %v436, %v69
    %v509 = vadd.f32 %v501, %v505
    %v510 = vadd.f32 %v502, %v506
    %v511 = vadd.f32 %v503, %v507
    %v512 = vadd.f32 %v504, %v508
    %v513 = vmul.f32 %v480, %v73
    %v514 = vmul.f32 %v480, %v77
    %v515 = vmul.f32 %v480, %v81
    %v516 = vmul.f32 %v480, %v85
    %v517 = vadd.f32 %v509, %v513
    %v518 = vadd.f32 %v510, %v514
    %v519 = vadd.f32 %v511, %v515
    %v520 = vadd.f32 %v512, %v516
    %v521 = vlaneseq
    %v522 = vshrl.u32 %v521, 7
    %v523 = vsub.s32 4, %v522
    %v524 = vrot.slane %v128, %v523
    %v525 = vmul.f32 %v524, %v89
    %v526 = vmul.f32 %v524, %v93
    %v527 = vmul.f32 %v524, %v97
    %v528 = vmul.f32 %v524, %v101
    %v529 = vadd.f32 %v517, %v525
    %v530 = vadd.f32 %v518, %v526
    %v531 = vadd.f32 %v519, %v527
    %v532 = vadd.f32 %v520, %v528
    %v533 = vmax.f32 %v489, %v529
    %v534 = vmax.f32 %v490, %v530
    %v535 = vmax.f32 %v491, %v531
    %v536 = vmax.f32 %v492, %v532
    %v537 = vmul.f32 %v392, %v22
    %v538 = vmul.f32 %v392, %v27
    %v539 = vmul.f32 %v392, %v32
    %v540 = vmul.f32 %v392, %v37
    %v541 = vmul.f32 %v436, %v41
    %v542 = vmul.f32 %v436, %v45
    %v543 = vmul.f32 %v436, %v49
    %v544 = vmul.f32 %v436, %v53
    %v545 = vadd.f32 %v537, %v541
    %v546 = vadd.f32 %v538, %v542
    %v547 = vadd.f32 %v539, %v543
    %v548 = vadd.f32 %v540, %v544
    %v549 = vmul.f32 %v480, %v57
    %v550 = vmul.f32 %v480, %v61
    %v551 = vmul.f32 %v480, %v65
    %v552 = vmul.f32 %v480, %v69
    %v553 = vadd.f32 %v545, %v549
    %v554 = vadd.f32 %v546, %v550
    %v555 = vadd.f32 %v547, %v551
    %v556 = vadd.f32 %v548, %v552
    %v557 = vmul.f32 %v524, %v73
    %v558 = vmul.f32 %v524, %v77
    %v559 = vmul.f32 %v524, %v81
    %v560 = vmul.f32 %v524, %v85
    %v561 = vadd.f32 %v553, %v557
    %v562 = vadd.f32 %v554, %v558
    %v563 = vadd.f32 %v555, %v559
    %v564 = vadd.f32 %v556, %v560
    %v565 = vlaneseq
    %v566 = vshrl.u32 %v565, 7
    %v567 = vsub.s32 5, %v566
    %v568 = vrot.slane %v128, %v567
    %v569 = vmul.f32 %v568, %v89
    %v570 = vmul.f32 %v568, %v93
    %v571 = vmul.f32 %v568, %v97
    %v572 = vmul.f32 %v568, %v101
    %v573 = vadd.f32 %v561, %v569
    %v574 = vadd.f32 %v562, %v570
    %v575 = vadd.f32 %v563, %v571
    %v576 = vadd.f32 %v564, %v572
    %v577 = vmax.f32 %v533, %v573
    %v578 = vmax.f32 %v534, %v574
    %v579 = vmax.f32 %v535, %v575
    %v580 = vmax.f32 %v536, %v576
    %v581 = vmul.f32 %v436, %v22
    %v582 = vmul.f32 %v436, %v27
    %v583 = vmul.f32 %v436, %v32
    %v584 = vmul.f32 %v436, %v37
    %v585 = vmul.f32 %v480, %v41
    %v586 = vmul.f32 %v480, %v45
    %v587 = vmul.f32 %v480, %v49
    %v588 = vmul.f32 %v480, %v53
    %v589 = vadd.f32 %v581, %v585
    %v590 = vadd.f32 %v582, %v586
    %v591 = vadd.f32 %v583, %v587
    %v592 = vadd.f32 %v584, %v588
    %v593 = vmul.f32 %v524, %v57
    %v594 = vmul.f32 %v524, %v61
    %v595 = vmul.f32 %v524, %v65
    %v596 = vmul.f32 %v524, %v69
    %v597 = vadd.f32 %v589, %v593
    %v598 = vadd.f32 %v590, %v594
    %v599 = vadd.f32 %v591, %v595
    %v600 = vadd.f32 %v592, %v596
    %v601 = vmul.f32 %v568, %v73
    %v602 = vmul.f32 %v568, %v77
    %v603 = vmul.f32 %v568, %v81
    %v604 = vmul.f32 %v568, %v85
    %v605 = vadd.f32 %v597, %v601
    %v606 = vadd.f32 %v598, %v602
    %v607 = vadd.f32 %v599, %v603
    %v608 = vadd.f32 %v600, %v604
    %v609 = vlaneseq
    %v610 = vshrl.u32 %v609, 7
    %v611 = vsub.s32 6, %v610
    %v612 = vrot.slane %v128, %v611
    %v613 = vmul.f32 %v612, %v89
    %v614 = vmul.f32 %v612, %v93
    %v615 = vmul.f32 %v612, %v97
    %v616 = vmul.f32 %v612, %v101
    %v617 = vadd.f32 %v605, %v613
    %v618 = vadd.f32 %v606, %v614
    %v619 = vadd.f32 %v607, %v615
    %v620 = vadd.f32 %v608, %v616
    %v621 = vmax.f32 %v577, %v617
    %v622 = vmax.f32 %v578, %v618
    %v623 = vmax.f32 %v579, %v619
    %v624 = vmax.f32 %v580, %v620
    %v625 = vmul.f32 %v480, %v22
    %v626 = vmul.f32 %v480, %v27
    %v627 = vmul.f32 %v480, %v32
    %v628 = vmul.f32 %v480, %v37
    %v629 = vmul.f32 %v524, %v41
    %v630 = vmul.f32 %v524, %v45
    %v631 = vmul.f32 %v524, %v49
    %v632 = vmul.f32 %v524, %v53
    %v633 = vadd.f32 %v625, %v629
    %v634 = vadd.f32 %v626, %v630
    %v635 = vadd.f32 %v627, %v631
    %v636 = vadd.f32 %v628, %v632
    %v637 = vmul.f32 %v568, %v57
    %v638 = vmul.f32 %v568, %v61
    %v639 = vmul.f32 %v568, %v65
    %v640 = vmul.f32 %v568, %v69
    %v641 = vadd.f32 %v633, %v637
    %v642 = vadd.f32 %v634, %v638
    %v643 = vadd.f32 %v635, %v639
    %v644 = vadd.f32 %v636, %v640
    %v645 = vmul.f32 %v612, %v73
    %v646 = vmul.f32 %v612, %v77
    %v647 = vmul.f32 %v612, %v81
    %v648 = vmul.f32 %v612, %v85
    %v649 = vadd.f32 %v641, %v645
    %v650 = vadd.f32 %v642, %v646
    %v651 = vadd.f32 %v643, %v647
    %v652 = vadd.f32 %v644, %v648
    %v653 = vlaneseq
    %v654 = vshrl.u32 %v653, 7
    %v655 = vsub.s32 7, %v654
    %v656 = vrot.slane %v128, %v655
    %v657 = vmul.f32 %v656, %v89
    %v658 = vmul.f32 %v656, %v93
    %v659 = vmul.f32 %v656, %v97
    %v660 = vmul.f32 %v656, %v101
    %v661 = vadd.f32 %v649, %v657
    %v662 = vadd.f32 %v650, %v658
    %v663 = vadd.f32 %v651, %v659
    %v664 = vadd.f32 %v652, %v660
    %v665 = vmax.f32 %v621, %v661
    %v666 = vmax.f32 %v622, %v662
    %v667 = vmax.f32 %v623, %v663
    %v668 = vmax.f32 %v624, %v664
    %v669 = vadd.f32 %v665, %v110
    %v670 = vadd.f32 %v666, %v115
    %v671 = vadd.f32 %v667, %v120
    %v672 = vadd.f32 %v668, %v125
    %v673 = vmax.f32 %v669, 0.0
    %v674 = vmax.f32 %v670, 0.0
    %v675 = vmax.f32 %v671, 0.0
    %v676 = vmax.f32 %v672, 0.0
    %677 = vst [vmem:[#allocation2] sm:$0xff] %v673
    %678 = vst [vmem:[#allocation2 + $0x8] sm:$0xff] %v674
    %679 = vst [vmem:[#allocation2 + $0x10] sm:$0xff] %v675
    %680 = vst [vmem:[#allocation2 + $0x18] sm:$0xff] %v676
    // Predicated region
    $region14: #{tpu_custom_call.1} parent=1 // pred_check
      _
    $region15: #{tpu_custom_call.1} parent=1 // pred_check_branch
      %682 = sbr.rel (0) target = $region17
    $region16: #{tpu_custom_call.1} parent=1 // pred_region
      %s684 = ssub.s32 512, 512
      %685 = vsyncadd [#allocation3], %s684
      %s686 = sshll.u32 [#allocation2], 4
      %s687 = int_to_ptr.vmem [resolvable:$true] %s686
      %692 = dma.vmem_to_hbm [thread:$0]  %s687, 512, %s3, [#allocation3], 128, 128, 8
    $region17: #{tpu_custom_call.1} parent=1 // pred_fallthru
      _
    // Predicated region
    $region18: #{tpu_custom_call.1} parent=1 // pred_check
      _
    $region19: #{tpu_custom_call.1} parent=1 // pred_check_branch
      %694 = sbr.rel (0) target = $region21
    $region20: #{tpu_custom_call.1} parent=1 // pred_region
      %695 = dma.done [#allocation3], 512
    $region21: #{tpu_custom_call.1} parent=1 // pred_fallthru
      _
    %696 = vsyncpa [#allocation3], 1

</llo_original>
